<compile_context>
chip_gen: v6e
topology: v6e:2x2x1
jax: 0.10.0
libtpu: 0.0.40
codegen_flags: <defaults>
</compile_context>

<pallas_src>
import functools

import jax
import jax.numpy as jnp
from jax.experimental import pallas as pl
from jax.experimental.pallas import tpu as pltpu


# --------------------------------------------------------------------------
# shared elementwise focal-loss math (runs on VPU/EUP inside the kernels)
# --------------------------------------------------------------------------
def _static_pow(x, gamma):
    """x ** gamma; small integer gamma lowered to multiplies (VPU, not EUP)."""
    if isinstance(gamma, (int, float)) and float(gamma) == int(gamma) and 0 <= int(gamma) <= 8:
        g = int(gamma)
        if g == 0:
            return jnp.ones_like(x)
        acc, base = None, x
        while g:
            if g & 1:
                acc = base if acc is None else acc * base
            g >>= 1
            if g:
                base = base * base
        return acc
    return x ** gamma


def _focal_elementwise(yp, yt, alpha, gamma, logits):
    yp = yp.astype(jnp.float32)
    yt = yt.astype(jnp.float32)   # labels may arrive as int8/bool (1 B HBM stream)
    if logits:
        yp = jax.nn.sigmoid(yp)
    pt_pos = jnp.clip(jnp.where(yt == 1.0, yp, 1.0), 0.001, 0.999)
    pt_neg = jnp.clip(jnp.where(yt == 0.0, yp, 0.0), 0.001, 0.999)
    pos_ = _static_pow(1.0 - pt_pos, gamma)
    neg_ = _static_pow(pt_neg, gamma)
    pos_loss = (-alpha) * pos_ * jnp.log(pt_pos)
    neg_loss = (alpha - 1.0) * neg_ * jnp.log(1.0 - pt_neg)
    return pos_loss + neg_loss


# --------------------------------------------------------------------------
# reducing kernel (sampling == 'mean' / 'sum')
# --------------------------------------------------------------------------
def _focal_loss_reduce_kernel(y_pred_ref, y_true_ref, out_ref, acc_ref, *,
                              alpha, gamma, logits, n_rows, tile_rows,
                              n_cols, needs_mask):
    c = pl.program_id(0)          # parallel split (TensorCore shard on v7x)
    i = pl.program_id(1)          # tile within split (reduction axis)
    n_tiles = pl.num_programs(1)

    @pl.when(i == 0)
    def _():
        acc_ref[...] = jnp.zeros_like(acc_ref)

    loss = _focal_elementwise(y_pred_ref[...], y_true_ref[...], alpha, gamma, logits)

    if needs_mask:
        # zero contributions from padded rows
        row0 = (c * n_tiles + i) * tile_rows
        local = jax.lax.broadcasted_iota(jnp.int32, loss.shape, 0)
        loss = jnp.where(row0 + local < n_rows, loss, 0.0)

    # fold (tile_rows, n_cols) -> (8, n_cols) with pure vreg adds (free reshape)
    acc_ref[...] += loss.reshape(tile_rows // 8, 8, n_cols).sum(axis=0)

    @pl.when(i == n_tiles - 1)
    def _():
        # collapse lane groups with vreg-aligned slices (still no XLU reduce),
        # then store one full, unmasked (8,128) output block for this split.
        a = acc_ref[:, 0:128]
        for g in range(1, n_cols // 128):
            a = a + acc_ref[:, g * 128:(g + 1) * 128]
        out_ref[...] = a


# --------------------------------------------------------------------------
# elementwise kernel (sampling is None -> return the unreduced loss)
# --------------------------------------------------------------------------
def _focal_loss_map_kernel(y_pred_ref, y_true_ref, out_ref, *, alpha, gamma, logits):
    out_ref[...] = _focal_elementwise(y_pred_ref[...], y_true_ref[...],
                                      alpha, gamma, logits)


# --------------------------------------------------------------------------
# wrapper
# --------------------------------------------------------------------------
def _round_up(x, m):
    return (x + m - 1) // m * m


def _sublane_align(dtype):
    # f32 -> 8 rows, bf16 -> 16, int8/bool -> 32 (packed sublanes)
    return max(8, 32 // max(1, jnp.dtype(dtype).itemsize))


def _choose_tile_rows(requested, row_align, bytes_per_row, needed_rows,
                      budget_bytes=12 << 20):
    by_vmem = budget_bytes // (2 * bytes_per_row)   # 2 = double buffering
    tr = min(requested, by_vmem, needed_rows)
    return max(row_align, (tr // row_align) * row_align)


def focal_loss(y_pred, y_true, *, alpha=0.25, gamma=2, logits=False,
               sampling="mean", tile_rows=1024, num_splits=2):
    """Focal loss forward pass. y_pred/y_true: (n_rows, n_cols), n_cols % 128 == 0.

    y_true may be float, bool or int8 (binary labels); sampling in
    {'mean', 'sum', None}.
    """
    assert y_pred.shape == y_true.shape and y_pred.ndim == 2
    n_rows, n_cols = y_pred.shape
    assert n_cols % 128 == 0, "last dim must be a multiple of 128 (lane width)"
    assert sampling in ("mean", "sum", None)

    row_align = max(_sublane_align(y_pred.dtype), _sublane_align(y_true.dtype))
    pred_b = jnp.dtype(y_pred.dtype).itemsize
    true_b = jnp.dtype(y_true.dtype).itemsize
    alpha = float(alpha)

    if sampling is None:
        # -------- elementwise (unreduced) path --------
        bytes_per_row = n_cols * (pred_b + true_b + 4)  # includes f32 output
        tr = _choose_tile_rows(tile_rows, row_align, bytes_per_row,
                               _round_up(n_rows, row_align))
        n_tiles = pl.cdiv(n_rows, tr)
        padded_rows = n_tiles * tr
        if padded_rows != n_rows:
            pad = padded_rows - n_rows
            y_pred = jnp.pad(y_pred, ((0, pad), (0, 0)))
            y_true = jnp.pad(y_true, ((0, pad), (0, 0)))

        out = pl.pallas_call(
            functools.partial(_focal_loss_map_kernel,
                              alpha=alpha, gamma=gamma, logits=logits),
            out_shape=jax.ShapeDtypeStruct((padded_rows, n_cols), jnp.float32),
            grid_spec=pltpu.PrefetchScalarGridSpec(
                num_scalar_prefetch=0,
                grid=(n_tiles,),
                in_specs=[pl.BlockSpec((tr, n_cols), lambda i: (i, 0)),
                          pl.BlockSpec((tr, n_cols), lambda i: (i, 0))],
                out_specs=pl.BlockSpec((tr, n_cols), lambda i: (i, 0)),
            ),
            compiler_params=pltpu.CompilerParams(
                dimension_semantics=("parallel",)),
        )(y_pred, y_true)
        return out[:n_rows]

    # -------- reducing path ('mean' / 'sum') --------
    splits = max(1, int(num_splits))
    bytes_per_row = n_cols * (pred_b + true_b)
    needed_rows = _round_up(pl.cdiv(n_rows, splits), row_align)
    tr = _choose_tile_rows(tile_rows, row_align, bytes_per_row, needed_rows)
    n_tiles = pl.cdiv(n_rows, splits * tr)            # tiles per split
    padded_rows = splits * n_tiles * tr
    needs_mask = padded_rows != n_rows
    if needs_mask:
        pad = padded_rows - n_rows
        y_pred = jnp.pad(y_pred, ((0, pad), (0, 0)))
        y_true = jnp.pad(y_true, ((0, pad), (0, 0)))

    kernel = functools.partial(
        _focal_loss_reduce_kernel,
        alpha=alpha, gamma=gamma, logits=logits,
        n_rows=n_rows, tile_rows=tr, n_cols=n_cols, needs_mask=needs_mask,
    )

    in_map = lambda c, i: (c * n_tiles + i, 0)   # noqa: E731
    out = pl.pallas_call(
        kernel,
        out_shape=jax.ShapeDtypeStruct((splits * 8, 128), jnp.float32),
        grid_spec=pltpu.PrefetchScalarGridSpec(
            num_scalar_prefetch=0,
            grid=(splits, n_tiles),
            in_specs=[pl.BlockSpec((tr, n_cols), in_map),
                      pl.BlockSpec((tr, n_cols), in_map)],
            out_specs=pl.BlockSpec((8, 128), lambda c, i: (c, 0)),
            scratch_shapes=[pltpu.VMEM((8, n_cols), jnp.float32)],
        ),
        compiler_params=pltpu.CompilerParams(
            dimension_semantics=("parallel", "arbitrary")),
    )(y_pred, y_true)

    total = jnp.sum(out)          # (splits*8, 128) partial lane sums -> scalar
    if sampling == "mean":
        total = total / jnp.float32(n_rows * n_cols)
    return total


# --------------------------------------------------------------------------
# pure-JAX reference (mirror of the PyTorch module)
# --------------------------------------------------------------------------
def focal_loss_ref(y_pred, y_true, *, alpha=0.25, gamma=2, logits=False,
                   sampling="mean"):
    yp = y_pred.astype(jnp.float32)
    yt = y_true.astype(jnp.float32)
    if logits:
        yp = jax.nn.sigmoid(yp)
    pt_pos = jnp.clip(jnp.where(yt == 1.0, yp, 1.0), 0.001, 0.999)
    pt_neg = jnp.clip(jnp.where(yt == 0.0, yp, 0.0), 0.001, 0.999)
    pos_ = (1.0 - pt_pos) ** gamma
    neg_ = pt_neg ** gamma
    loss = -alpha * pos_ * jnp.log(pt_pos) - (1.0 - alpha) * neg_ * jnp.log(1.0 - pt_neg)
    if sampling == "mean":
        return loss.mean()
    elif sampling == "sum":
        return loss.sum()
    return loss


if __name__ == "__main__":
    key = jax.random.PRNGKey(0)
    k1, k2, k3 = jax.random.split(key, 3)

    n_rows, n_cols = 16, 128
    y_pred = jax.random.uniform(k1, (n_rows, n_cols), jnp.float32, 0.001, 0.999)
    y_true_f = jax.random.bernoulli(k2, 0.3, (n_rows, n_cols)).astype(jnp.float32)
    y_true_i8 = y_true_f.astype(jnp.int8)        # low-bandwidth label stream

    # mean, f32 labels
    out = jax.block_until_ready(focal_loss(y_pred, y_true_f, sampling="mean"))
    ref = focal_loss_ref(y_pred, y_true_f, sampling="mean")
    assert jnp.allclose(out, ref, rtol=1e-5, atol=1e-6), (out, ref)

    # sum, int8 labels
    out = jax.block_until_ready(focal_loss(y_pred, y_true_i8, sampling="sum"))
    ref = focal_loss_ref(y_pred, y_true_f, sampling="sum")
    assert jnp.allclose(out, ref, rtol=1e-5, atol=1e-5), (out, ref)

    # logits=True, mean
    raw = jax.random.normal(k3, (n_rows, n_cols), jnp.float32)
    out = jax.block_until_ready(focal_loss(raw, y_true_f, logits=True, sampling="mean"))
    ref = focal_loss_ref(raw, y_true_f, logits=True, sampling="mean")
    assert jnp.allclose(out, ref, rtol=1e-5, atol=1e-6), (out, ref)

    # sampling=None (unreduced elementwise loss)
    out = jax.block_until_ready(focal_loss(y_pred, y_true_f, sampling=None))
    ref = focal_loss_ref(y_pred, y_true_f, sampling=None)
    assert out.shape == ref.shape and jnp.allclose(out, ref, rtol=1e-5, atol=1e-6)

    print("KERNEL_OK")
</pallas_src>

<mosaic_0001>
module attributes {stable_mosaic.version = 11 : i64} {
  func.func @_focal_loss_reduce_kernel(%arg0: i32, %arg1: i32, %arg2: memref<8x128xf32, #tpu.memory_space<vmem>>, %arg3: memref<8x128xf32, #tpu.memory_space<vmem>>, %arg4: memref<8x128xf32, #tpu.memory_space<vmem>>, %arg5: memref<8x128xf32, #tpu.memory_space<vmem>>) attributes {dimension_semantics = [#tpu.dimension_semantics<parallel>, #tpu.dimension_semantics<arbitrary>], iteration_bounds = array<i64: 2, 1>, scalar_prefetch = 0 : i64, scratch_operands = 1 : i64, tpu.core_type = #tpu.core_type<tc>, window_params = [{transform_indices = @transform_0, window_bounds = array<i64: 8, 128>}, {transform_indices = @transform_1, window_bounds = array<i64: 8, 128>}, {transform_indices = @transform_2, window_bounds = array<i64: 8, 128>}]} {
    %c0_i32 = arith.constant 0 : i32
    %0 = arith.cmpi eq, %arg1, %c0_i32 : i32
    %1 = arith.extui %0 : i1 to i32
    %c0_i32_0 = arith.constant 0 : i32
    %2 = arith.cmpi ne, %1, %c0_i32_0 : i32
    scf.if %2 {
      %cst_22 = arith.constant 0.000000e+00 : f32
      %44 = vector.broadcast %cst_22 : f32 to vector<8x128xf32>
      %c0_23 = arith.constant 0 : index
      %c0_24 = arith.constant 0 : index
      %45 = vector.load %arg5[%c0_23, %c0_24] : memref<8x128xf32, #tpu.memory_space<vmem>>, vector<8x128xf32>
      tpu.vector_store %arg5[%c0_23, %c0_24], %44 {strides = array<i32>} : memref<8x128xf32, #tpu.memory_space<vmem>>, vector<8x128xf32>,
    } else {
    }
    %c0 = arith.constant 0 : index
    %c0_1 = arith.constant 0 : index
    %3 = vector.load %arg2[%c0, %c0_1] : memref<8x128xf32, #tpu.memory_space<vmem>>, vector<8x128xf32>
    %c0_2 = arith.constant 0 : index
    %c0_3 = arith.constant 0 : index
    %4 = vector.load %arg3[%c0_2, %c0_3] : memref<8x128xf32, #tpu.memory_space<vmem>>, vector<8x128xf32>
    %cst = arith.constant 1.000000e+00 : f32
    %5 = vector.broadcast %cst : f32 to vector<8x128xf32>
    %6 = arith.cmpf oeq, %4, %5 : vector<8x128xf32>
    %cst_4 = arith.constant 1.000000e+00 : f32
    %7 = vector.broadcast %cst_4 : f32 to vector<8x128xf32>
    %8 = arith.select %6, %3, %7 : vector<8x128xi1>, vector<8x128xf32>
    %cst_5 = arith.constant 1.000000e-03 : f32
    %cst_6 = arith.constant 9.990000e-01 : f32
    %9 = vector.broadcast %cst_5 : f32 to vector<8x128xf32>
    %10 = arith.maximumf %9, %8 : vector<8x128xf32>
    %11 = vector.broadcast %cst_6 : f32 to vector<8x128xf32>
    %12 = arith.minimumf %11, %10 : vector<8x128xf32>
    %cst_7 = arith.constant 0.000000e+00 : f32
    %13 = vector.broadcast %cst_7 : f32 to vector<8x128xf32>
    %14 = arith.cmpf oeq, %4, %13 : vector<8x128xf32>
    %cst_8 = arith.constant 0.000000e+00 : f32
    %15 = vector.broadcast %cst_8 : f32 to vector<8x128xf32>
    %16 = arith.select %14, %3, %15 : vector<8x128xi1>, vector<8x128xf32>
    %cst_9 = arith.constant 1.000000e-03 : f32
    %cst_10 = arith.constant 9.990000e-01 : f32
    %17 = vector.broadcast %cst_9 : f32 to vector<8x128xf32>
    %18 = arith.maximumf %17, %16 : vector<8x128xf32>
    %19 = vector.broadcast %cst_10 : f32 to vector<8x128xf32>
    %20 = arith.minimumf %19, %18 : vector<8x128xf32>
    %cst_11 = arith.constant 1.000000e+00 : f32
    %21 = vector.broadcast %cst_11 : f32 to vector<8x128xf32>
    %22 = arith.subf %21, %12 : vector<8x128xf32>
    %23 = arith.mulf %22, %22 : vector<8x128xf32>
    %24 = arith.mulf %20, %20 : vector<8x128xf32>
    %cst_12 = arith.constant -2.500000e-01 : f32
    %25 = vector.broadcast %cst_12 : f32 to vector<8x128xf32>
    %26 = arith.mulf %25, %23 : vector<8x128xf32>
    %27 = math.log %12 : vector<8x128xf32>
    %28 = arith.mulf %26, %27 : vector<8x128xf32>
    %cst_13 = arith.constant -7.500000e-01 : f32
    %29 = vector.broadcast %cst_13 : f32 to vector<8x128xf32>
    %30 = arith.mulf %29, %24 : vector<8x128xf32>
    %cst_14 = arith.constant 1.000000e+00 : f32
    %31 = vector.broadcast %cst_14 : f32 to vector<8x128xf32>
    %32 = arith.subf %31, %20 : vector<8x128xf32>
    %33 = math.log %32 : vector<8x128xf32>
    %34 = arith.mulf %30, %33 : vector<8x128xf32>
    %35 = arith.addf %28, %34 : vector<8x128xf32>
    %c0_15 = arith.constant 0 : index
    %c0_16 = arith.constant 0 : index
    %36 = vector.load %arg5[%c0_15, %c0_16] : memref<8x128xf32, #tpu.memory_space<vmem>>, vector<8x128xf32>
    %37 = vector.shape_cast %35 : vector<8x128xf32> to vector<1x8x128xf32>
    %cst_17 = arith.constant dense<0.000000e+00> : vector<8x128xf32>
    %38 = vector.multi_reduction <add>, %37, %cst_17 [0] : vector<1x8x128xf32> to vector<8x128xf32>
    %39 = arith.addf %36, %38 : vector<8x128xf32>
    %c0_18 = arith.constant 0 : index
    %c0_19 = arith.constant 0 : index
    %40 = vector.load %arg5[%c0_18, %c0_19] : memref<8x128xf32, #tpu.memory_space<vmem>>, vector<8x128xf32>
    tpu.vector_store %arg5[%c0_18, %c0_19], %39 {strides = array<i32>} : memref<8x128xf32, #tpu.memory_space<vmem>>, vector<8x128xf32>,
    %c0_i32_20 = arith.constant 0 : i32
    %41 = arith.cmpi eq, %arg1, %c0_i32_20 : i32
    %42 = arith.extui %41 : i1 to i32
    %c0_i32_21 = arith.constant 0 : i32
    %43 = arith.cmpi ne, %42, %c0_i32_21 : i32
    scf.if %43 {
      %c0_22 = arith.constant 0 : index
      %c0_23 = arith.constant 0 : index
      %44 = vector.load %arg5[%c0_22, %c0_23] : memref<8x128xf32, #tpu.memory_space<vmem>>, vector<8x128xf32>
      %c0_24 = arith.constant 0 : index
      %c0_25 = arith.constant 0 : index
      %45 = vector.load %arg4[%c0_24, %c0_25] : memref<8x128xf32, #tpu.memory_space<vmem>>, vector<8x128xf32>
      tpu.vector_store %arg4[%c0_24, %c0_25], %44 {strides = array<i32>} : memref<8x128xf32, #tpu.memory_space<vmem>>, vector<8x128xf32>,
    } else {
    }
    return
  }
  func.func @transform_0(%arg0: i32, %arg1: i32) -> (i32, i32) {
    %c1_i32 = arith.constant 1 : i32
    %0 = arith.muli %arg0, %c1_i32 : i32
    %1 = arith.addi %0, %arg1 : i32
    %c0_i32 = arith.constant 0 : i32
    %c0_i32_0 = arith.constant 0 : i32
    return %1, %c0_i32 : i32, i32
  }
  func.func @transform_1(%arg0: i32, %arg1: i32) -> (i32, i32) {
    %c1_i32 = arith.constant 1 : i32
    %0 = arith.muli %arg0, %c1_i32 : i32
    %1 = arith.addi %0, %arg1 : i32
    %c0_i32 = arith.constant 0 : i32
    %c0_i32_0 = arith.constant 0 : i32
    return %1, %c0_i32 : i32, i32
  }
  func.func @transform_2(%arg0: i32, %arg1: i32) -> (i32, i32) {
    %c0_i32 = arith.constant 0 : i32
    %c0_i32_0 = arith.constant 0 : i32
    return %arg0, %c0_i32 : i32, i32
  }
}

</mosaic_0001>

<llo_original>
// kernel: tpu_custom_call.1
$region0: #{tpu_custom_call.1}
  #allocation0 [shape = 'u32[]', space=smem, size = 0x4, offset = 0x4, fixed_abs, tag = 'smem constant byte address 0x4 - core index']
  #allocation1 [shape = 'u32[144,128]{1,0:T(1,128)}', space=vmem, size = 0x12000, scoped, tag = 'internal scratch']
  #allocation2 [shape = 'f32[8,128]{1,0:T(8,128)}', space=vmem, size = 0x1000, scoped, tag = 'scratch operand']
  %s0 = inlined_call_operand.hbm [shape: f32[16,128], index: 0, kind: input, shape index: {}]
  %s1 = inlined_call_operand.hbm [shape: f32[16,128], index: 1, kind: input, shape index: {}]
  %s2 = inlined_call_operand.hbm [shape: f32[16,128], index: 2, kind: output, shape index: {}]
  %s3 = sld [smem:[#allocation0]]
  $region57: #{tpu_custom_call.1} parent=0
    _
  %s5 = ssub.s32 1, %s3
  %s6 = scalar_select 0, %s5, %s3
  $region1: #{tpu_custom_call.1} parent=0
    #allocation3 [shape = 'u8[8192]{0}', space=vmem, size = 0x2000, scoped, tag = 'input window, operand 0']
    #allocation4 [shape = 's32[2]{0}', space=sflag, size = 0x8, scoped, tag = 'scoped memory for tpu_custom_call.1']
    #allocation5 [shape = 's32[2]{0}', space=sflag, size = 0x8, scoped, tag = 'scoped memory for tpu_custom_call.1']
    #allocation6 [shape = 'u8[8192]{0}', space=vmem, size = 0x2000, scoped, tag = 'input window, operand 1']
    #allocation7 [shape = 's32[2]{0}', space=sflag, size = 0x8, scoped, tag = 'scoped memory for tpu_custom_call.1']
    #allocation8 [shape = 'u8[8192]{0}', space=vmem, size = 0x2000, scoped, tag = 'output window, operand 0']
    %7 = vsyncpa [#allocation4], 0
    %s8 = scalar_lea.sflag [#allocation4], 1
    %9 = vsyncpa %s8, 0
    %10 = vsyncpa [#allocation7], 0
    %s11 = scalar_lea.sflag [#allocation7], 1
    %12 = vsyncpa %s11, 0
    %13 = vsyncpa [#allocation5], 0
    %s14 = scalar_lea.sflag [#allocation5], 1
    %15 = vsyncpa %s14, 0
    loop: start=0, step=1, limit=4
    $region2: #{tpu_custom_call.1} parent=1 // loop_pre_header
      _
    $region3: #{tpu_custom_call.1} parent=1 // loop_header
      %s17 = sphi 0, %s21
      %p18 = scmp.ge.s32.totalorder %s17, 4
      %s24 = sphi 0, %s36
      %s25 = sphi 0, %s32
      %s26 = sphi 0, %s24
      %s27 = sphi 0, %s25
      %s28 = sphi 0, %s26
      %s29 = sphi 0, %s27
      %s41 = sphi 0, %s43
      %s44 = sphi 0, %s41
      %s45 = sphi 0, %s44
      %s61 = sphi 0, %s45
      %s69 = sphi 0, %s71
      %s72 = sphi 0, %s69
      %s73 = sphi 0, %s72
      %s89 = sphi 0, %s73
      %s95 = sphi 0, %s97
      %s98 = sphi 0, %s95
      %s99 = sphi 0, %s98
      %s115 = sphi 0, %s99
    $region4: #{tpu_custom_call.1} parent=1 // loop_header_branch
      %20 = sbr.rel (%p18) target = $region8
    $region5: #{tpu_custom_call.1} parent=1 // loop_body
      %s22 = ssub.s32 %s17, 1
      %s23 = ssub.s32 %s17, 2
      %s30 = sadd.s32 1, %s25
      %p31 = scmp.ge.s32.totalorder %s30, 1
      %s32 = scalar_select %p31, 0, %s30
      %s33 = sadd.s32 1, %s24
      %s34 = scalar_select %p31, %s33, %s24
      %p35 = scmp.ge.s32.totalorder %s34, 2
      %s36 = scalar_select %p35, 0, %s34
      %s37 = sadd.s32 %s24, %s25
      %s38 = sadd.s32 %s36, %s32
      %s39 = ssub.s32 %s37, %s38
      %p40 = scmp.eq.s32.totalorder %s39, 0
      %s42 = sadd.s32 %s41, 1
      %s43 = scalar_select %p40, %s41, %s42
      %p46 = pneg %p40
      %p47 = scmp.eq.s32.totalorder %s17, 1
      %p48 = por %p46, %p47
      %p49 = scmp.ne.s32.totalorder %s41, %s44
      %p50 = scmp.eq.s32.totalorder %s17, 0
      %p51 = por %p49, %p50
      %p52 = scmp.ne.s32.totalorder %s41, %s44
      %p53 = scmp.eq.s32.totalorder %s22, 1
      %p54 = por %p52, %p53
      %p55 = scmp.ne.s32.totalorder %s44, %s45
      %p56 = scmp.eq.s32.totalorder %s22, 0
      %p57 = por %p55, %p56
      %p58 = scmp.ne.s32.totalorder %s44, %s45
      %p59 = scmp.eq.s32.totalorder %s23, 1
      %p60 = por %p58, %p59
      %p62 = scmp.ne.s32.totalorder %s45, %s61
      %p63 = scmp.eq.s32.totalorder %s23, 0
      %p64 = por %p62, %p63
      %s65 = sadd.s32 %s24, %s25
      %s66 = sadd.s32 %s36, %s32
      %s67 = ssub.s32 %s65, %s66
      %p68 = scmp.eq.s32.totalorder %s67, 0
      %s70 = sadd.s32 %s69, 1
      %s71 = scalar_select %p68, %s69, %s70
      %p74 = pneg %p68
      %p75 = scmp.eq.s32.totalorder %s17, 1
      %p76 = por %p74, %p75
      %p77 = scmp.ne.s32.totalorder %s69, %s72
      %p78 = scmp.eq.s32.totalorder %s17, 0
      %p79 = por %p77, %p78
      %p80 = scmp.ne.s32.totalorder %s69, %s72
      %p81 = scmp.eq.s32.totalorder %s22, 1
      %p82 = por %p80, %p81
      %p83 = scmp.ne.s32.totalorder %s72, %s73
      %p84 = scmp.eq.s32.totalorder %s22, 0
      %p85 = por %p83, %p84
      %p86 = scmp.ne.s32.totalorder %s72, %s73
      %p87 = scmp.eq.s32.totalorder %s23, 1
      %p88 = por %p86, %p87
      %p90 = scmp.ne.s32.totalorder %s73, %s89
      %p91 = scmp.eq.s32.totalorder %s23, 0
      %p92 = por %p90, %p91
      %s93 = ssub.s32 %s24, %s36
      %p94 = scmp.eq.s32.totalorder %s93, 0
      %s96 = sadd.s32 %s95, 1
      %s97 = scalar_select %p94, %s95, %s96
      %p100 = pneg %p94
      %p101 = scmp.eq.s32.totalorder %s17, 1
      %p102 = por %p100, %p101
      %p103 = scmp.ne.s32.totalorder %s95, %s98
      %p104 = scmp.eq.s32.totalorder %s17, 0
      %p105 = por %p103, %p104
      %p106 = scmp.ne.s32.totalorder %s95, %s98
      %p107 = scmp.eq.s32.totalorder %s22, 1
      %p108 = por %p106, %p107
      %p109 = scmp.ne.s32.totalorder %s98, %s99
      %p110 = scmp.eq.s32.totalorder %s22, 0
      %p111 = por %p109, %p110
      %p112 = scmp.ne.s32.totalorder %s98, %s99
      %p113 = scmp.eq.s32.totalorder %s23, 1
      %p114 = por %p112, %p113
      %p116 = scmp.ne.s32.totalorder %s99, %s115
      %p117 = scmp.eq.s32.totalorder %s23, 0
      %p118 = por %p116, %p117
      %p119 = scmp.le.s32.totalorder 1, %s17
      %p120 = scmp.lt.s32.totalorder %s17, 3
      %p121 = pnand %p119, %p120
      %p122 = pneg %p121
      // Predicated region
      $region9: #{tpu_custom_call.1} parent=5 // pred_check
        _
      $region10: #{tpu_custom_call.1} parent=5 // pred_check_branch
        %124 = sbr.rel (%p121) target = $region12
      $region11: #{tpu_custom_call.1} parent=5 // pred_region
        %s125 = ssub.s32 %s17, 1
      $region12: #{tpu_custom_call.1} parent=5 // pred_fallthru
        _
      %p126 = scmp.lt.s32.totalorder %s17, 2
      // Predicated region
      $region13: #{tpu_custom_call.1} parent=5 // pred_check
        %p127 = pneg %p126
      $region14: #{tpu_custom_call.1} parent=5 // pred_check_branch
        %129 = sbr.rel (%p127) target = $region16
      $region15: #{tpu_custom_call.1} parent=5 // pred_region
        // Predicated region
        $region17: #{tpu_custom_call.1} parent=15 // pred_check
          %p130 = pneg %p51
        $region18: #{tpu_custom_call.1} parent=15 // pred_check_branch
          %132 = sbr.rel (%p130) target = $region20
        $region19: #{tpu_custom_call.1} parent=15 // pred_region
          %s133 = sand.u32 %s41, 1
          %s134 = scalar_lea.sflag [#allocation4], %s133
          %s135 = sand.u32 %s41, 1
          %s136 = smul.addr %s135, 8
          %s137 = scalar_lea.vmem [#allocation3], %s136
          %s138 = sadd.s32 %s24, %s25
          %s140 = ssub.s32 128, 128
          %141 = vsyncadd %s134, %s140
          %s142 = smul.addr %s138, 128
          %s143 = scalar_lea.hbm %s0, %s142
          %s145 = sshll.u32 %s137, 4
          %s146 = int_to_ptr.vmem [resolvable:$true] %s145
          %148 = dma.hbm_to_vmem [thread:$0]  %s143, 128, %s146, %s134
        $region20: #{tpu_custom_call.1} parent=15 // pred_fallthru
          _
        // Predicated region
        $region21: #{tpu_custom_call.1} parent=15 // pred_check
          %p149 = pneg %p79
        $region22: #{tpu_custom_call.1} parent=15 // pred_check_branch
          %151 = sbr.rel (%p149) target = $region24
        $region23: #{tpu_custom_call.1} parent=15 // pred_region
          %s152 = sand.u32 %s69, 1
          %s153 = scalar_lea.sflag [#allocation7], %s152
          %s154 = sand.u32 %s69, 1
          %s155 = smul.addr %s154, 8
          %s156 = scalar_lea.vmem [#allocation6], %s155
          %s157 = sadd.s32 %s24, %s25
          %s159 = ssub.s32 128, 128
          %160 = vsyncadd %s153, %s159
          %s161 = smul.addr %s157, 128
          %s162 = scalar_lea.hbm %s1, %s161
          %s164 = sshll.u32 %s156, 4
          %s165 = int_to_ptr.vmem [resolvable:$true] %s164
          %167 = dma.hbm_to_vmem [thread:$0]  %s162, 128, %s165, %s153
        $region24: #{tpu_custom_call.1} parent=15 // pred_fallthru
          _
      $region16: #{tpu_custom_call.1} parent=5 // pred_fallthru
        _
      %p168 = scmp.le.s32.totalorder 1, %s17
      %p169 = scmp.lt.s32.totalorder %s17, 3
      %p170 = pnand %p168, %p169
      %p171 = pneg %p170
      // Predicated region
      $region25: #{tpu_custom_call.1} parent=5 // pred_check
        _
      $region26: #{tpu_custom_call.1} parent=5 // pred_check_branch
        %173 = sbr.rel (%p170) target = $region28
      $region27: #{tpu_custom_call.1} parent=5 // pred_region
        %s174 = ssub.s32 %s17, 1
        %s175 = sand.u32 %s44, 1
        %s176 = scalar_lea.sflag [#allocation4], %s175
        %s177 = sand.u32 %s44, 1
        %s178 = smul.addr %s177, 8
        %s179 = scalar_lea.vmem [#allocation3], %s178
        // Predicated region
        $region29: #{tpu_custom_call.1} parent=27 // pred_check
          %p180 = pneg %p57
        $region30: #{tpu_custom_call.1} parent=27 // pred_check_branch
          %182 = sbr.rel (%p180) target = $region32
        $region31: #{tpu_custom_call.1} parent=27 // pred_region
          %183 = dma.done %s176, 128
        $region32: #{tpu_custom_call.1} parent=27 // pred_fallthru
          _
        %s184 = sand.u32 %s72, 1
        %s185 = scalar_lea.sflag [#allocation7], %s184
        %s186 = sand.u32 %s72, 1
        %s187 = smul.addr %s186, 8
        %s188 = scalar_lea.vmem [#allocation6], %s187
        // Predicated region
        $region33: #{tpu_custom_call.1} parent=27 // pred_check
          %p189 = pneg %p85
        $region34: #{tpu_custom_call.1} parent=27 // pred_check_branch
          %191 = sbr.rel (%p189) target = $region36
        $region35: #{tpu_custom_call.1} parent=27 // pred_region
          %192 = dma.done %s185, 128
        $region36: #{tpu_custom_call.1} parent=27 // pred_fallthru
          _
        %s193 = sand.u32 %s44, 1
        %s194 = scalar_lea.sflag [#allocation4], %s193
        %s195 = sand.u32 %s44, 1
        %s196 = smul.addr %s195, 8
        %s197 = scalar_lea.vmem [#allocation3], %s196
        %p198 = pneg %p57
        %p199 = pneg %p54
        %s200 = sand.u32 %s72, 1
        %s201 = scalar_lea.sflag [#allocation7], %s200
        %s202 = sand.u32 %s72, 1
        %s203 = smul.addr %s202, 8
        %s204 = scalar_lea.vmem [#allocation6], %s203
        %p205 = pneg %p85
        %p206 = pneg %p82
        %p207 = pneg %p111
        %p208 = pneg %p108
        %s209 = sand.u32 %s98, 1
        %s210 = scalar_lea.sflag [#allocation5], %s209
        %s211 = sand.u32 %s98, 1
        %s212 = smul.addr %s211, 8
        %s213 = scalar_lea.vmem [#allocation8], %s212
        %s214 = sadd.s32 %s26, %s27
        %s215 = sadd.s32 %s26, %s27
        %p216 = scmp.eq.s32.totalorder %s27, 0
        // Predicated region
        $region37: #{tpu_custom_call.1} parent=27 // pred_check
          %p217 = pneg %p216
        $region38: #{tpu_custom_call.1} parent=27 // pred_check_branch
          %219 = sbr.rel (%p217) target = $region40
        $region39: #{tpu_custom_call.1} parent=27 // pred_region
          %220 = vst [vmem:[#allocation2] sm:$0xff] 0.0
        $region40: #{tpu_custom_call.1} parent=27 // pred_fallthru
          _
        %v221 = vld [vmem:[%s179] sm:$0xff]
        %v222 = vld [vmem:[%s188] sm:$0xff]
        %vm223 = vcmp.eq.f32.partialorder %v222, 1.0
        %v224 = vsel %vm223, %v221, 1.0
        %v225 = vmax.f32 %v224, 0.001
        %v226 = vmin.f32 %v225, 0.999
        %vm227 = vcmp.eq.f32.partialorder %v222, 0.0
        %v228 = vsel %vm227, %v221, 0.0
        %v229 = vmax.f32 %v228, 0.001
        %v230 = vmin.f32 %v229, 0.999
        %v231 = vsub.f32 1.0, %v226
        %v232 = vmul.f32 %v231, %v231
        %v233 = vmul.f32 %v230, %v230
        %v234 = vmul.f32 %v232, -0.25
        %v235 = vlog2.pop %v226
        %v236 = vmul.f32 %v235, 0.6931472
        %v237 = vmul.f32 %v234, %v236
        %v238 = vmul.f32 %v233, -0.75
        %v239 = vsub.f32 1.0, %v230
        %v240 = vlog2.pop %v239
        %v241 = vmul.f32 %v240, 0.6931472
        %v242 = vmul.f32 %v238, %v241
        %v243 = vadd.f32 %v237, %v242
        %v244 = vld [vmem:[#allocation2] sm:$0xff]
        %v245 = vadd.f32 %v243, 0.0
        %v246 = vadd.f32 %v244, %v245
        %247 = vst [vmem:[#allocation2] sm:$0xff] %v246
        // Predicated region
        $region41: #{tpu_custom_call.1} parent=27 // pred_check
          %p248 = pneg %p216
        $region42: #{tpu_custom_call.1} parent=27 // pred_check_branch
          %250 = sbr.rel (%p248) target = $region44
        $region43: #{tpu_custom_call.1} parent=27 // pred_region
          %v251 = vld [vmem:[#allocation2] sm:$0xff]
          %252 = vst [vmem:[%s213] sm:$0xff] %v251
        $region44: #{tpu_custom_call.1} parent=27 // pred_fallthru
          _
        %s253 = sand.u32 %s98, 1
        %s254 = scalar_lea.sflag [#allocation5], %s253
        %s255 = sand.u32 %s98, 1
        %s256 = smul.addr %s255, 8
        %s257 = scalar_lea.vmem [#allocation8], %s256
        // Predicated region
        $region45: #{tpu_custom_call.1} parent=27 // pred_check
          %p258 = pneg %p108
        $region46: #{tpu_custom_call.1} parent=27 // pred_check_branch
          %260 = sbr.rel (%p258) target = $region48
        $region47: #{tpu_custom_call.1} parent=27 // pred_region
          %s262 = ssub.s32 128, 128
          %263 = vsyncadd %s254, %s262
          %s264 = smul.addr %s26, 128
          %s265 = scalar_lea.hbm %s2, %s264
          %s267 = sshll.u32 %s257, 4
          %s268 = int_to_ptr.vmem [resolvable:$true] %s267
          %270 = dma.vmem_to_hbm [thread:$0]  %s268, 128, %s265, %s254
        $region48: #{tpu_custom_call.1} parent=27 // pred_fallthru
          _
      $region28: #{tpu_custom_call.1} parent=5 // pred_fallthru
        _
      %p271 = scmp.le.s32.totalorder 2, %s17
      // Predicated region
      $region49: #{tpu_custom_call.1} parent=5 // pred_check
        %p272 = pneg %p271
      $region50: #{tpu_custom_call.1} parent=5 // pred_check_branch
        %274 = sbr.rel (%p272) target = $region52
      $region51: #{tpu_custom_call.1} parent=5 // pred_region
        %s275 = ssub.s32 %s17, 2
        // Predicated region
        $region53: #{tpu_custom_call.1} parent=51 // pred_check
          %p276 = pneg %p114
        $region54: #{tpu_custom_call.1} parent=51 // pred_check_branch
          %278 = sbr.rel (%p276) target = $region56
        $region55: #{tpu_custom_call.1} parent=51 // pred_region
          %s279 = sand.u32 %s99, 1
          %s280 = scalar_lea.sflag [#allocation5], %s279
          %s281 = sand.u32 %s99, 1
          %s282 = smul.addr %s281, 8
          %s283 = scalar_lea.vmem [#allocation8], %s282
          %284 = dma.done %s280, 128
        $region56: #{tpu_custom_call.1} parent=51 // pred_fallthru
          _
      $region52: #{tpu_custom_call.1} parent=5 // pred_fallthru
        _
    $region6: #{tpu_custom_call.1} parent=1 // loop_footer
      %s21 = sadd.s32 1, %s17
    $region7: #{tpu_custom_call.1} parent=1 // loop_footer_branch
      %16 = sbr.rel target = $region3
    $region8: #{tpu_custom_call.1} parent=1 // loop_exit
      _
    %285 = vsyncpa [#allocation4], 1
    %s286 = scalar_lea.sflag [#allocation4], 1
    %287 = vsyncpa %s286, 1
    %288 = vsyncpa [#allocation7], 1
    %s289 = scalar_lea.sflag [#allocation7], 1
    %290 = vsyncpa %s289, 1
    %291 = vsyncpa [#allocation5], 1
    %s292 = scalar_lea.sflag [#allocation5], 1
    %293 = vsyncpa %s292, 1

</llo_original>
